<compile_context>
chip_gen: v7x
topology: tpu7x:2x2x1
jax: 0.10.0
libtpu: 0.0.40
codegen_flags: <defaults>
</compile_context>

<pallas_src>
import functools

import jax
import jax.numpy as jnp
from jax.experimental import pallas as pl
from jax.experimental.pallas import tpu as pltpu


# --------------------------------------------------------------------------
# Kernel
# --------------------------------------------------------------------------
def _mf_forward_kernel(tile_b, norm,
                       u_idx_ref, i_idx_ref,      # SMEM  (scalar prefetch)
                       u_tab_ref, i_tab_ref,      # HBM   (memory_space=pl.ANY)
                       ue_ref, ie_ref, res_ref,   # VMEM  output blocks
                       sem):                      # DMA semaphores, shape (2,)
    t = pl.program_id(0)
    base = t * tile_b

    # ---- Fused gather: DMA the indexed table rows directly into the output
    # blocks (which double as the compute buffers).  All 2*TILE_B row copies
    # are issued back-to-back so they overlap each other, then drained.
    @pl.loop(0, tile_b)
    def _issue(r):
        u_row = u_idx_ref[base + r]
        i_row = i_idx_ref[base + r]
        pltpu.make_async_copy(u_tab_ref.at[pl.ds(u_row, 1), :],
                              ue_ref.at[pl.ds(r, 1), :],
                              sem.at[0]).start()
        pltpu.make_async_copy(i_tab_ref.at[pl.ds(i_row, 1), :],
                              ie_ref.at[pl.ds(r, 1), :],
                              sem.at[1]).start()

    @pl.loop(0, tile_b)
    def _drain(r):
        # Wait descriptors only need the right shape + semaphore (each issued
        # copy is the same (1, D) size, so each wait retires exactly one copy).
        pltpu.make_async_copy(u_tab_ref.at[pl.ds(0, 1), :],
                              ue_ref.at[pl.ds(r, 1), :],
                              sem.at[0]).wait()
        pltpu.make_async_copy(i_tab_ref.at[pl.ds(0, 1), :],
                              ie_ref.at[pl.ds(r, 1), :],
                              sem.at[1]).wait()

    # ---- Compute: per-row dot product over the latent dim (f32 throughout).
    ue = ue_ref[...]                                     # [TILE_B, D]
    ie = ie_ref[...]
    inter = jnp.sum(ue * ie, axis=-1)                    # [TILE_B]
    if norm:
        inter = inter / jnp.sqrt(jnp.sum(ue * ue, axis=-1))
    res_ref[...] = inter[None, :]                        # lane-dense [1, TILE_B]


# --------------------------------------------------------------------------
# pallas_call wrapper
# --------------------------------------------------------------------------
@functools.partial(jax.jit, static_argnames=("tile_b", "norm"))
def _mf_forward_call(user_idx, item_idx, user_laten, item_laten, *, tile_b, norm):
    b_pad = user_idx.shape[0]
    num_tiles = b_pad // tile_b
    d = user_laten.shape[1]

    grid_spec = pltpu.PrefetchScalarGridSpec(
        num_scalar_prefetch=2,                 # user_idx, item_idx -> SMEM
        grid=(num_tiles,),
        in_specs=[
            pl.BlockSpec(memory_space=pl.ANY),   # user_laten table stays in HBM
            pl.BlockSpec(memory_space=pl.ANY),   # item_laten table stays in HBM
        ],
        out_specs=[
            pl.BlockSpec((tile_b, d), lambda t, u, it: (t, 0)),   # ue  [B_pad, D]
            pl.BlockSpec((tile_b, d), lambda t, u, it: (t, 0)),   # ie  [B_pad, D]
            pl.BlockSpec((1, tile_b), lambda t, u, it: (t, 0)),   # result (lane-dense)
        ],
        scratch_shapes=[pltpu.SemaphoreType.DMA((2,))],
    )

    ue, ie, res = pl.pallas_call(
        functools.partial(_mf_forward_kernel, tile_b, norm),
        grid_spec=grid_spec,
        out_shape=(
            jax.ShapeDtypeStruct((b_pad, d), jnp.float32),
            jax.ShapeDtypeStruct((b_pad, d), jnp.float32),
            jax.ShapeDtypeStruct((num_tiles, tile_b), jnp.float32),
        ),
        compiler_params=pltpu.CompilerParams(
            dimension_semantics=("parallel",)),      # v7x: shard tiles over 2 TCs
    )(user_idx, item_idx, user_laten, item_laten)
    return ue, ie, res.reshape(b_pad)


def _pick_tile_b(batch):
    # Large tiles amortize the ~0.35us/step grid overhead and keep write-back
    # DMAs long; VMEM is not the constraint at small D (512*D*4B per buffer).
    if batch >= 512:
        return 512
    return max(8, ((batch + 7) // 8) * 8)   # single tile, sublane-aligned


# --------------------------------------------------------------------------
# MFbasemode module (parameter setup = glue; forward compute = Pallas)
# --------------------------------------------------------------------------
class MFBaseModePallas:
    """JAX/Pallas port of the PyTorch MFbasemode forward pass."""

    def __init__(self, num_user, num_item, laten_factor, key):
        k1, k2, k3, k4 = jax.random.split(key, 4)
        # nn.Embedding default init: N(0, 1)
        self.user_bais = jax.random.normal(k1, (num_user, 1), jnp.float32)
        self.item_bais = jax.random.normal(k2, (num_item, 1), jnp.float32)
        self.user_laten = jax.random.normal(k3, (num_user, laten_factor), jnp.float32)
        self.item_laten = jax.random.normal(k4, (num_item, laten_factor), jnp.float32)
        self.user_num = num_user
        self.item_num = num_item
        self.hidden_dim = laten_factor

    def forward(self, user, item, norm=False):
        user = jnp.asarray(user, jnp.int32)
        item = jnp.asarray(item, jnp.int32)
        b = user.shape[0]
        tile_b = _pick_tile_b(b)
        b_pad = ((b + tile_b - 1) // tile_b) * tile_b
        # Pad index vectors with a valid row (0); padded rows are sliced off.
        user_p = jnp.zeros((b_pad,), jnp.int32).at[:b].set(user)
        item_p = jnp.zeros((b_pad,), jnp.int32).at[:b].set(item)
        ue, ie, res = _mf_forward_call(user_p, item_p,
                                       self.user_laten, self.item_laten,
                                       tile_b=tile_b, norm=bool(norm))
        return ue[:b], ie[:b], res[:b]


# --------------------------------------------------------------------------
# Main
# --------------------------------------------------------------------------
if __name__ == "__main__":
    key = jax.random.PRNGKey(0)
    kp, ku, ki = jax.random.split(key, 3)

    num_user, num_item, laten = 32, 48, 16
    batch = 8

    model = MFBaseModePallas(num_user, num_item, laten, kp)

    user = jax.random.randint(ku, (batch,), 0, num_user, dtype=jnp.int32)
    item = jax.random.randint(ki, (batch,), 0, num_item, dtype=jnp.int32)

    # norm=False branch
    ue, ie, result = model.forward(user, item)
    jax.block_until_ready((ue, ie, result))

    # norm=True branch
    ue_n, ie_n, result_n = model.forward(user, item, norm=True)
    jax.block_until_ready((ue_n, ie_n, result_n))

    # Pure-JAX reference check
    ref_ue = model.user_laten[user]
    ref_ie = model.item_laten[item]
    ref_res = jnp.sum(ref_ue * ref_ie, axis=-1)
    ref_res_n = ref_res / jnp.sqrt(jnp.sum(ref_ue * ref_ue, axis=-1))

    assert ue.shape == (batch, laten) and ie.shape == (batch, laten)
    assert result.shape == (batch,)
    assert jnp.allclose(ue, ref_ue, atol=1e-5, rtol=1e-5)
    assert jnp.allclose(ie, ref_ie, atol=1e-5, rtol=1e-5)
    assert jnp.allclose(result, ref_res, atol=1e-4, rtol=1e-4)
    assert jnp.allclose(result_n, ref_res_n, atol=1e-4, rtol=1e-4)

    print("KERNEL_OK")
</pallas_src>

<mosaic_0001>
module attributes {stable_mosaic.version = 11 : i64} {
  func.func @_mf_forward_kernel(%arg0: i32, %arg1: memref<8xi32, #tpu.memory_space<smem>>, %arg2: memref<8xi32, #tpu.memory_space<smem>>, %arg3: memref<32x16xf32, #tpu.memory_space<any>>, %arg4: memref<48x16xf32, #tpu.memory_space<any>>, %arg5: memref<8x16xf32, #tpu.memory_space<vmem>>, %arg6: memref<8x16xf32, #tpu.memory_space<vmem>>, %arg7: memref<1x8xf32, #tpu.memory_space<vmem>>, %arg8: memref<2x!tpu.dma_semaphore, #tpu.memory_space<semaphore_mem>>) attributes {dimension_semantics = [#tpu.dimension_semantics<parallel>], iteration_bounds = array<i64: 1>, scalar_prefetch = 2 : i64, scratch_operands = 1 : i64, tpu.core_type = #tpu.core_type<tc>, window_params = [{}, {}, {transform_indices = @transform_2, window_bounds = array<i64: 8, 16>}, {transform_indices = @transform_3, window_bounds = array<i64: 8, 16>}, {transform_indices = @transform_4, window_bounds = array<i64: 1, 8>}]} {
    %c8_i32 = arith.constant 8 : i32
    %0 = arith.muli %arg0, %c8_i32 : i32
    %c0_i32 = arith.constant 0 : i32
    %c8_i32_0 = arith.constant 8 : i32
    %1 = arith.addi %c0_i32, %c8_i32_0 : i32
    %c1_i32 = arith.constant 1 : i32
    scf.for %arg9 = %c0_i32 to %1 step %c1_i32  : i32 {
      %c1_i32_11 = arith.constant 1 : i32
      %9 = arith.muli %arg9, %c1_i32_11 : i32
      %c0_i32_12 = arith.constant 0 : i32
      %10 = arith.addi %c0_i32_12, %9 : i32
      %11 = arith.addi %0, %10 : i32
      %12 = arith.index_cast %11 : i32 to index
      %13 = memref.load %arg1[%12] : memref<8xi32, #tpu.memory_space<smem>>
      %14 = arith.addi %0, %10 : i32
      %15 = arith.index_cast %14 : i32 to index
      %16 = memref.load %arg2[%15] : memref<8xi32, #tpu.memory_space<smem>>
      %c0_i32_13 = arith.constant 0 : i32
      %c0_i32_14 = arith.constant 0 : i32
      %17 = tpu.memref_slice %arg3[%13, %c0_i32_14] : memref<32x16xf32, #tpu.memory_space<any>> -> memref<1x16xf32, #tpu.memory_space<any>>
      %c0_i32_15 = arith.constant 0 : i32
      %18 = tpu.memref_slice %arg5[%10, %c0_i32_15] : memref<8x16xf32, #tpu.memory_space<vmem>> -> memref<1x16xf32, #tpu.memory_space<vmem>>
      %19 = tpu.memref_slice %arg8[%c0_i32_13] : memref<2x!tpu.dma_semaphore, #tpu.memory_space<semaphore_mem>> -> memref<1x!tpu.dma_semaphore, #tpu.memory_space<semaphore_mem>>
      %20 = tpu.memref_squeeze %19 : memref<1x!tpu.dma_semaphore, #tpu.memory_space<semaphore_mem>> -> memref<!tpu.dma_semaphore, #tpu.memory_space<semaphore_mem>>
      tpu.enqueue_dma source(%17 : memref<1x16xf32, #tpu.memory_space<any>>) target(%18 : memref<1x16xf32, #tpu.memory_space<vmem>>) target_semaphore(%20 : memref<!tpu.dma_semaphore, #tpu.memory_space<semaphore_mem>>)
      %c1_i32_16 = arith.constant 1 : i32
      %c0_i32_17 = arith.constant 0 : i32
      %21 = tpu.memref_slice %arg4[%16, %c0_i32_17] : memref<48x16xf32, #tpu.memory_space<any>> -> memref<1x16xf32, #tpu.memory_space<any>>
      %c0_i32_18 = arith.constant 0 : i32
      %22 = tpu.memref_slice %arg6[%10, %c0_i32_18] : memref<8x16xf32, #tpu.memory_space<vmem>> -> memref<1x16xf32, #tpu.memory_space<vmem>>
      %23 = tpu.memref_slice %arg8[%c1_i32_16] : memref<2x!tpu.dma_semaphore, #tpu.memory_space<semaphore_mem>> -> memref<1x!tpu.dma_semaphore, #tpu.memory_space<semaphore_mem>>
      %24 = tpu.memref_squeeze %23 : memref<1x!tpu.dma_semaphore, #tpu.memory_space<semaphore_mem>> -> memref<!tpu.dma_semaphore, #tpu.memory_space<semaphore_mem>>
      tpu.enqueue_dma source(%21 : memref<1x16xf32, #tpu.memory_space<any>>) target(%22 : memref<1x16xf32, #tpu.memory_space<vmem>>) target_semaphore(%24 : memref<!tpu.dma_semaphore, #tpu.memory_space<semaphore_mem>>)
    }
    %c8_i32_1 = arith.constant 8 : i32
    %c0_i32_2 = arith.constant 0 : i32
    %c8_i32_3 = arith.constant 8 : i32
    %2 = arith.addi %c0_i32_2, %c8_i32_3 : i32
    %c1_i32_4 = arith.constant 1 : i32
    scf.for %arg9 = %c0_i32_2 to %2 step %c1_i32_4  : i32 {
      %c1_i32_11 = arith.constant 1 : i32
      %9 = arith.muli %arg9, %c1_i32_11 : i32
      %c0_i32_12 = arith.constant 0 : i32
      %10 = arith.addi %c0_i32_12, %9 : i32
      %c0_i32_13 = arith.constant 0 : i32
      %c0_i32_14 = arith.constant 0 : i32
      %c0_i32_15 = arith.constant 0 : i32
      %11 = tpu.memref_slice %arg3[%c0_i32_14, %c0_i32_15] : memref<32x16xf32, #tpu.memory_space<any>> -> memref<1x16xf32, #tpu.memory_space<any>>
      %c0_i32_16 = arith.constant 0 : i32
      %12 = tpu.memref_slice %arg5[%10, %c0_i32_16] : memref<8x16xf32, #tpu.memory_space<vmem>> -> memref<1x16xf32, #tpu.memory_space<vmem>>
      %13 = tpu.memref_slice %arg8[%c0_i32_13] : memref<2x!tpu.dma_semaphore, #tpu.memory_space<semaphore_mem>> -> memref<1x!tpu.dma_semaphore, #tpu.memory_space<semaphore_mem>>
      %14 = tpu.memref_squeeze %13 : memref<1x!tpu.dma_semaphore, #tpu.memory_space<semaphore_mem>> -> memref<!tpu.dma_semaphore, #tpu.memory_space<semaphore_mem>>
      tpu.wait_dma2 semaphore(%14 : memref<!tpu.dma_semaphore, #tpu.memory_space<semaphore_mem>>) src(%11 : memref<1x16xf32, #tpu.memory_space<any>>) dst(%12 : memref<1x16xf32, #tpu.memory_space<vmem>>)
      %c1_i32_17 = arith.constant 1 : i32
      %c0_i32_18 = arith.constant 0 : i32
      %c0_i32_19 = arith.constant 0 : i32
      %15 = tpu.memref_slice %arg4[%c0_i32_18, %c0_i32_19] : memref<48x16xf32, #tpu.memory_space<any>> -> memref<1x16xf32, #tpu.memory_space<any>>
      %c0_i32_20 = arith.constant 0 : i32
      %16 = tpu.memref_slice %arg6[%10, %c0_i32_20] : memref<8x16xf32, #tpu.memory_space<vmem>> -> memref<1x16xf32, #tpu.memory_space<vmem>>
      %17 = tpu.memref_slice %arg8[%c1_i32_17] : memref<2x!tpu.dma_semaphore, #tpu.memory_space<semaphore_mem>> -> memref<1x!tpu.dma_semaphore, #tpu.memory_space<semaphore_mem>>
      %18 = tpu.memref_squeeze %17 : memref<1x!tpu.dma_semaphore, #tpu.memory_space<semaphore_mem>> -> memref<!tpu.dma_semaphore, #tpu.memory_space<semaphore_mem>>
      tpu.wait_dma2 semaphore(%18 : memref<!tpu.dma_semaphore, #tpu.memory_space<semaphore_mem>>) src(%15 : memref<1x16xf32, #tpu.memory_space<any>>) dst(%16 : memref<1x16xf32, #tpu.memory_space<vmem>>)
    }
    %c8_i32_5 = arith.constant 8 : i32
    %c0 = arith.constant 0 : index
    %c0_6 = arith.constant 0 : index
    %3 = vector.load %arg5[%c0, %c0_6] : memref<8x16xf32, #tpu.memory_space<vmem>>, vector<8x16xf32>
    %c0_7 = arith.constant 0 : index
    %c0_8 = arith.constant 0 : index
    %4 = vector.load %arg6[%c0_7, %c0_8] : memref<8x16xf32, #tpu.memory_space<vmem>>, vector<8x16xf32>
    %5 = arith.mulf %3, %4 : vector<8x16xf32>
    %cst = arith.constant dense<0.000000e+00> : vector<8xf32>
    %6 = vector.multi_reduction <add>, %5, %cst [1] : vector<8x16xf32> to vector<8xf32>
    %7 = vector.shape_cast %6 : vector<8xf32> to vector<1x8xf32>
    %c0_9 = arith.constant 0 : index
    %c0_10 = arith.constant 0 : index
    %8 = vector.load %arg7[%c0_9, %c0_10] : memref<1x8xf32, #tpu.memory_space<vmem>>, vector<1x8xf32>
    tpu.vector_store %arg7[%c0_9, %c0_10], %7 {strides = array<i32>} : memref<1x8xf32, #tpu.memory_space<vmem>>, vector<1x8xf32>,
    return
  }
  func.func @transform_2(%arg0: i32, %arg1: memref<8xi32, #tpu.memory_space<smem>>, %arg2: memref<8xi32, #tpu.memory_space<smem>>) -> (i32, i32) {
    %c0_i32 = arith.constant 0 : i32
    %c0_i32_0 = arith.constant 0 : i32
    return %arg0, %c0_i32 : i32, i32
  }
  func.func @transform_3(%arg0: i32, %arg1: memref<8xi32, #tpu.memory_space<smem>>, %arg2: memref<8xi32, #tpu.memory_space<smem>>) -> (i32, i32) {
    %c0_i32 = arith.constant 0 : i32
    %c0_i32_0 = arith.constant 0 : i32
    return %arg0, %c0_i32 : i32, i32
  }
  func.func @transform_4(%arg0: i32, %arg1: memref<8xi32, #tpu.memory_space<smem>>, %arg2: memref<8xi32, #tpu.memory_space<smem>>) -> (i32, i32) {
    %c0_i32 = arith.constant 0 : i32
    %c0_i32_0 = arith.constant 0 : i32
    return %arg0, %c0_i32 : i32, i32
  }
}

</mosaic_0001>

<llo_original>
// kernel: _mf_forward_call.1
$region0: #{_mf_forward_call.1}
  #allocation0 [shape = 'u32[]', space=smem, size = 0x4, offset = 0x4, fixed_abs, tag = 'smem constant byte address 0x4 - core index']
  #allocation1 [shape = 'u32[144,128]{1,0:T(1,128)}', space=vmem, size = 0x12000, scoped, tag = 'internal scratch']
  #allocation2 [shape = 's32[2]{0}', space=sflag, size = 0x8, scoped, tag = 'scratch operand']
  #allocation3 [shape = 's32[1]{0}', space=sflag, size = 0x4, scoped, tag = 'scoped memory for _mf_forward_call.1']
  #allocation4 [shape = 'u8[512]{0}', space=smem, size = 0x200, scoped, tag = 'prefetched SMEM operand 0']
  #allocation5 [shape = 'u8[512]{0}', space=smem, size = 0x200, scoped, tag = 'prefetched SMEM operand 1']
  #allocation11 [shape = 's32[]', space=sflag, size = 0x4, offset = 0, fixed_abs, tag = 'sflag constant byte address 0x0 - dummy sync flag']
  #allocation12 [shape = 's32[]', space=sflag, size = 0x4, offset = 0, fixed_abs, tag = 'sflag constant byte address 0x0 - dummy sync flag']
  %s0 = inlined_call_operand.vmem [shape: s32[8], index: 0, kind: input, shape index: {}]
  %s1 = inlined_call_operand.vmem [shape: s32[8], index: 1, kind: input, shape index: {}]
  %s2 = inlined_call_operand.vmem [shape: f32[32,16], index: 2, kind: input, shape index: {}]
  %s3 = inlined_call_operand.vmem [shape: f32[48,16], index: 3, kind: input, shape index: {}]
  %s4 = inlined_call_operand.hbm [shape: f32[8,16], index: 4, kind: output, shape index: {0}]
  %s5 = inlined_call_operand.hbm [shape: f32[8,16], index: 5, kind: output, shape index: {1}]
  %s6 = inlined_call_operand.hbm [shape: f32[1,8], index: 6, kind: output, shape index: {2}]
  %7 = xla_tuple %s4, %s5, %s6
  %s8 = sld [smem:[#allocation0]]
  $region100: #{_mf_forward_call.1} parent=0
    _
  %s10 = ssub.s32 1, %s8
  %s11 = scalar_select 0, %s10, %s8
  %s12 = sshll.u32 %s0, 4
  %s13 = int_to_ptr.vmem [resolvable:$true] %s12
  %15 = dma.vmem_to_smem %s13, 16, [#allocation4], [#allocation3]
  %s16 = sshll.u32 %s1, 4
  %s17 = int_to_ptr.vmem [resolvable:$true] %s16
  %19 = dma.vmem_to_smem %s17, 16, [#allocation5], [#allocation3]
  %20 = dma.done [#allocation3], 32
  %21 = sfence
  $region1: #{_mf_forward_call.1} parent=0
    #allocation6 [shape = 'u8[4096]{0}', space=vmem, size = 0x1000, scoped, tag = 'output window, operand 0, single buffered']
    #allocation7 [shape = 's32[1]{0}', space=sflag, size = 0x4, scoped, tag = 'scoped memory for _mf_forward_call.1']
    #allocation8 [shape = 'u8[4096]{0}', space=vmem, size = 0x1000, scoped, tag = 'output window, operand 1, single buffered']
    #allocation9 [shape = 's32[1]{0}', space=sflag, size = 0x4, scoped, tag = 'scoped memory for _mf_forward_call.1']
    #allocation10 [shape = 'u8[512]{0}', space=vmem, size = 0x400, scoped, tag = 'output window, operand 2, single buffered']
    %22 = vsyncpa [#allocation7], 0
    %23 = vsyncpa [#allocation9], 0
    %s24 = smul.u32 0, 8
    loop: start=0, step=1, limit=8
    $region2: #{_mf_forward_call.1} parent=1 // loop_pre_header
      _
    $region3: #{_mf_forward_call.1} parent=1 // loop_header
      %s26 = sphi 0, %s30
      %p27 = scmp.ge.s32.totalorder %s26, 8
    $region4: #{_mf_forward_call.1} parent=1 // loop_header_branch
      %29 = sbr.rel (%p27) target = $region8
    $region5: #{_mf_forward_call.1} parent=1 // loop_body
      %s31 = sadd.s32 %s24, %s26
      %s32 = sld [smem:[#allocation4 + %s31]]
      %s33 = sld [smem:[#allocation5 + %s31]]
      %s34 = scalar_lea.vmem %s2, %s32
      %s35 = scalar_lea.vmem [#allocation6], %s26
      %p37 = scmp.lt.u32.totalorder 1, 8
      %p38 = pneg %p37
      // Predicated region
      $region9: #{_mf_forward_call.1} parent=5 // pred_check
        _
      $region10: #{_mf_forward_call.1} parent=5 // pred_check_branch
        %40 = sbr.rel (%p37) target = $region12
      $region11: #{_mf_forward_call.1} parent=5 // pred_region
        %s55 = sand.u32 1, 7
        %p56 = scmp.eq.s32.totalorder %s55, 0
        %p57 = pneg %p56
        // Predicated region
        $region24: #{_mf_forward_call.1} parent=11 // pred_check
          _
        $region25: #{_mf_forward_call.1} parent=11 // pred_check_branch
          %59 = sbr.rel (%p56) target = $region27
        $region26: #{_mf_forward_call.1} parent=11 // pred_region
          %s60 = sand.u32 1, 7
          %s61 = ssub.s32 1, %s60
          %s62 = scalar_lea.vmem %s34, %s61
          %s63 = ssub.s32 1, %s60
          %s64 = scalar_lea.vmem %s35, %s63 [#allocation6]
          %s65 = sshllo.u32 0, %s60
          loop: start=0, step=1, limit=1
          $region28: #{_mf_forward_call.1} parent=26 // loop_pre_header
            _
          $region29: #{_mf_forward_call.1} parent=26 // loop_header
            %s67 = sphi 0, %s71
            %p68 = scmp.ge.s32.totalorder %s67, 1
            %s72 = sphi %s62, %s62
            %s73 = sphi %s64, %s64
          $region30: #{_mf_forward_call.1} parent=26 // loop_header_branch
            %70 = sbr.rel (%p68) target = $region34
          $region31: #{_mf_forward_call.1} parent=26 // loop_body
            %v74 = vld [vmem:[%s72] sm:%s65]
            %75 = vst [vmem:[%s73] sm:%s65] %v74
          $region32: #{_mf_forward_call.1} parent=26 // loop_footer
            %s71 = sadd.s32 1, %s67
          $region33: #{_mf_forward_call.1} parent=26 // loop_footer_branch
            %66 = sbr.rel target = $region29
          $region34: #{_mf_forward_call.1} parent=26 // loop_exit
            _
        $region27: #{_mf_forward_call.1} parent=11 // pred_fallthru
          _
      $region12: #{_mf_forward_call.1} parent=5 // pred_fallthru
        _
      // Predicated region
      $region13: #{_mf_forward_call.1} parent=5 // pred_check
        %p41 = pneg %p37
      $region14: #{_mf_forward_call.1} parent=5 // pred_check_branch
        %43 = sbr.rel (%p41) target = $region16
      $region15: #{_mf_forward_call.1} parent=5 // pred_region
        %s44 = sshllo.u32 0, 1
        loop: start=0, step=1, limit=1
        $region17: #{_mf_forward_call.1} parent=15 // loop_pre_header
          _
        $region18: #{_mf_forward_call.1} parent=15 // loop_header
          %s46 = sphi 0, %s50
          %p47 = scmp.ge.s32.totalorder %s46, 1
          %s51 = sphi %s34, %s34
          %s52 = sphi %s35, %s35
        $region19: #{_mf_forward_call.1} parent=15 // loop_header_branch
          %49 = sbr.rel (%p47) target = $region23
        $region20: #{_mf_forward_call.1} parent=15 // loop_body
          %v53 = vld [vmem:[%s51] sm:%s44]
          %54 = vst [vmem:[%s52] sm:%s44] %v53
        $region21: #{_mf_forward_call.1} parent=15 // loop_footer
          %s50 = sadd.s32 1, %s46
        $region22: #{_mf_forward_call.1} parent=15 // loop_footer_branch
          %45 = sbr.rel target = $region18
        $region23: #{_mf_forward_call.1} parent=15 // loop_exit
          _
      $region16: #{_mf_forward_call.1} parent=5 // pred_fallthru
        _
      // Predicated region
      $region35: #{_mf_forward_call.1} parent=5 // pred_check
        _
      $region36: #{_mf_forward_call.1} parent=5 // pred_check_branch
        %78 = sbr.rel (0) target = $region38
      $region37: #{_mf_forward_call.1} parent=5 // pred_region
        %79 = vsyncadd [#allocation2], 16
      $region38: #{_mf_forward_call.1} parent=5 // pred_fallthru
        _
      %s80 = scalar_lea.vmem %s3, %s33
      %s81 = scalar_lea.vmem [#allocation8], %s26
      %s82 = scalar_lea.sflag [#allocation2], 1
      %p84 = scmp.lt.u32.totalorder 1, 8
      %p85 = pneg %p84
      // Predicated region
      $region39: #{_mf_forward_call.1} parent=5 // pred_check
        _
      $region40: #{_mf_forward_call.1} parent=5 // pred_check_branch
        %87 = sbr.rel (%p84) target = $region42
      $region41: #{_mf_forward_call.1} parent=5 // pred_region
        %s102 = sand.u32 1, 7
        %p103 = scmp.eq.s32.totalorder %s102, 0
        %p104 = pneg %p103
        // Predicated region
        $region54: #{_mf_forward_call.1} parent=41 // pred_check
          _
        $region55: #{_mf_forward_call.1} parent=41 // pred_check_branch
          %106 = sbr.rel (%p103) target = $region57
        $region56: #{_mf_forward_call.1} parent=41 // pred_region
          %s107 = sand.u32 1, 7
          %s108 = ssub.s32 1, %s107
          %s109 = scalar_lea.vmem %s80, %s108
          %s110 = ssub.s32 1, %s107
          %s111 = scalar_lea.vmem %s81, %s110 [#allocation8]
          %s112 = sshllo.u32 0, %s107
          loop: start=0, step=1, limit=1
          $region58: #{_mf_forward_call.1} parent=56 // loop_pre_header
            _
          $region59: #{_mf_forward_call.1} parent=56 // loop_header
            %s114 = sphi 0, %s118
            %p115 = scmp.ge.s32.totalorder %s114, 1
            %s119 = sphi %s109, %s109
            %s120 = sphi %s111, %s111
          $region60: #{_mf_forward_call.1} parent=56 // loop_header_branch
            %117 = sbr.rel (%p115) target = $region64
          $region61: #{_mf_forward_call.1} parent=56 // loop_body
            %v121 = vld [vmem:[%s119] sm:%s112]
            %122 = vst [vmem:[%s120] sm:%s112] %v121
          $region62: #{_mf_forward_call.1} parent=56 // loop_footer
            %s118 = sadd.s32 1, %s114
          $region63: #{_mf_forward_call.1} parent=56 // loop_footer_branch
            %113 = sbr.rel target = $region59
          $region64: #{_mf_forward_call.1} parent=56 // loop_exit
            _
        $region57: #{_mf_forward_call.1} parent=41 // pred_fallthru
          _
      $region42: #{_mf_forward_call.1} parent=5 // pred_fallthru
        _
      // Predicated region
      $region43: #{_mf_forward_call.1} parent=5 // pred_check
        %p88 = pneg %p84
      $region44: #{_mf_forward_call.1} parent=5 // pred_check_branch
        %90 = sbr.rel (%p88) target = $region46
      $region45: #{_mf_forward_call.1} parent=5 // pred_region
        %s91 = sshllo.u32 0, 1
        loop: start=0, step=1, limit=1
        $region47: #{_mf_forward_call.1} parent=45 // loop_pre_header
          _
        $region48: #{_mf_forward_call.1} parent=45 // loop_header
          %s93 = sphi 0, %s97
          %p94 = scmp.ge.s32.totalorder %s93, 1
          %s98 = sphi %s80, %s80
          %s99 = sphi %s81, %s81
        $region49: #{_mf_forward_call.1} parent=45 // loop_header_branch
          %96 = sbr.rel (%p94) target = $region53
        $region50: #{_mf_forward_call.1} parent=45 // loop_body
          %v100 = vld [vmem:[%s98] sm:%s91]
          %101 = vst [vmem:[%s99] sm:%s91] %v100
        $region51: #{_mf_forward_call.1} parent=45 // loop_footer
          %s97 = sadd.s32 1, %s93
        $region52: #{_mf_forward_call.1} parent=45 // loop_footer_branch
          %92 = sbr.rel target = $region48
        $region53: #{_mf_forward_call.1} parent=45 // loop_exit
          _
      $region46: #{_mf_forward_call.1} parent=5 // pred_fallthru
        _
      // Predicated region
      $region65: #{_mf_forward_call.1} parent=5 // pred_check
        _
      $region66: #{_mf_forward_call.1} parent=5 // pred_check_branch
        %125 = sbr.rel (0) target = $region68
      $region67: #{_mf_forward_call.1} parent=5 // pred_region
        %126 = vsyncadd %s82, 16
      $region68: #{_mf_forward_call.1} parent=5 // pred_fallthru
        _
    $region6: #{_mf_forward_call.1} parent=1 // loop_footer
      %s30 = sadd.s32 1, %s26
    $region7: #{_mf_forward_call.1} parent=1 // loop_footer_branch
      %25 = sbr.rel target = $region3
    $region8: #{_mf_forward_call.1} parent=1 // loop_exit
      _
    loop: start=0, step=1, limit=8
    $region69: #{_mf_forward_call.1} parent=1 // loop_pre_header
      _
    $region70: #{_mf_forward_call.1} parent=1 // loop_header
      %s128 = sphi 0, %s132
      %p129 = scmp.ge.s32.totalorder %s128, 8
    $region71: #{_mf_forward_call.1} parent=1 // loop_header_branch
      %131 = sbr.rel (%p129) target = $region75
    $region72: #{_mf_forward_call.1} parent=1 // loop_body
      %s133 = smul.u32 1, 1
      %s134 = sshll.u32 %s133, 4
      %135 = dma.done [#allocation2], %s134
      %s136 = scalar_lea.sflag [#allocation2], 1
      %s137 = sshll.u32 %s133, 4
      %138 = dma.done %s136, %s137
    $region73: #{_mf_forward_call.1} parent=1 // loop_footer
      %s132 = sadd.s32 1, %s128
    $region74: #{_mf_forward_call.1} parent=1 // loop_footer_branch
      %127 = sbr.rel target = $region70
    $region75: #{_mf_forward_call.1} parent=1 // loop_exit
      _
    %v139 = vld [vmem:[#allocation6] sm:$0xff]
    %v140 = vld [vmem:[#allocation8] sm:$0xff]
    %v141 = vmul.f32 %v139, %v140
    %vm142 = vcmask 130048
    %v143 = vsel %vm142, %v141, 0.0
    %144 = vadd.xlane.f32.xlu0 %v143
    %v145 = vpop.xlane.xlu0 %144
    %v147 = vlaneseq
    %v148 = vand.u32 %v147, 127
    %v149 = vlaneseq
    %v150 = vshrl.u32 %v149, 7
    %v151 = vsub.s32 %v148, %v150
    %v152 = vrot.slane %v145, %v151
    %vm154 = vcmask 57344
    %155 = vst.msk [vmem:[#allocation10] sm:$0x1] %vm154, %v152
    // Predicated region
    $region76: #{_mf_forward_call.1} parent=1 // pred_check
      _
    $region77: #{_mf_forward_call.1} parent=1 // pred_check_branch
      %157 = sbr.rel (0) target = $region79
    $region78: #{_mf_forward_call.1} parent=1 // pred_region
      %s159 = ssub.s32 128, 128
      %160 = vsyncadd [#allocation7], %s159
      %s162 = sshll.u32 [#allocation6], 4
      %s163 = int_to_ptr.vmem [resolvable:$true] %s162
      %165 = dma.vmem_to_hbm [thread:$0]  %s163, 128, %s4, [#allocation7]
    $region79: #{_mf_forward_call.1} parent=1 // pred_fallthru
      _
    // Predicated region
    $region80: #{_mf_forward_call.1} parent=1 // pred_check
      _
    $region81: #{_mf_forward_call.1} parent=1 // pred_check_branch
      %167 = sbr.rel (0) target = $region83
    $region82: #{_mf_forward_call.1} parent=1 // pred_region
      %s169 = ssub.s32 128, 128
      %170 = vsyncadd [#allocation9], %s169
      %s172 = sshll.u32 [#allocation8], 4
      %s173 = int_to_ptr.vmem [resolvable:$true] %s172
      %175 = dma.vmem_to_hbm [thread:$0]  %s173, 128, %s5, [#allocation9]
    $region83: #{_mf_forward_call.1} parent=1 // pred_fallthru
      _
    // Predicated region
    $region84: #{_mf_forward_call.1} parent=1 // pred_check
      _
    $region85: #{_mf_forward_call.1} parent=1 // pred_check_branch
      %177 = sbr.rel (0) target = $region87
    $region86: #{_mf_forward_call.1} parent=1 // pred_region
      %s179 = ssub.s32 16, 16
      %180 = vsyncadd [#allocation9], %s179
      %s182 = sshll.u32 [#allocation10], 4
      %s183 = int_to_ptr.vmem [resolvable:$true] %s182
      %185 = dma.vmem_to_hbm [thread:$0]  %s183, 16, %s6, [#allocation9]
    $region87: #{_mf_forward_call.1} parent=1 // pred_fallthru
      _
    // Predicated region
    $region88: #{_mf_forward_call.1} parent=1 // pred_check
      _
    $region89: #{_mf_forward_call.1} parent=1 // pred_check_branch
      %187 = sbr.rel (0) target = $region91
    $region90: #{_mf_forward_call.1} parent=1 // pred_region
      %188 = dma.done [#allocation7], 128
    $region91: #{_mf_forward_call.1} parent=1 // pred_fallthru
      _
    // Predicated region
    $region92: #{_mf_forward_call.1} parent=1 // pred_check
      _
    $region93: #{_mf_forward_call.1} parent=1 // pred_check_branch
      %190 = sbr.rel (0) target = $region95
    $region94: #{_mf_forward_call.1} parent=1 // pred_region
      %191 = dma.done [#allocation9], 128
    $region95: #{_mf_forward_call.1} parent=1 // pred_fallthru
      _
    // Predicated region
    $region96: #{_mf_forward_call.1} parent=1 // pred_check
      _
    $region97: #{_mf_forward_call.1} parent=1 // pred_check_branch
      %193 = sbr.rel (0) target = $region99
    $region98: #{_mf_forward_call.1} parent=1 // pred_region
      %194 = dma.done [#allocation9], 16
    $region99: #{_mf_forward_call.1} parent=1 // pred_fallthru
      _
    %195 = vsyncpa [#allocation7], 1
    %196 = vsyncpa [#allocation9], 1
  %197 = vsyncmov [#allocation2]
  %s198 = vpop.sfrf %197
  %p199 = scmp.eq.s32.totalorder %s198, 0
  %p200 = pneg %p199
  %202 = shalt.err (%p200)
  %s203 = scalar_lea.sflag [#allocation2], 1
  %204 = vsyncmov %s203
  %s205 = vpop.sfrf %204
  %p206 = scmp.eq.s32.totalorder %s205, 0
  %p207 = pneg %p206
  %209 = shalt.err (%p207)

</llo_original>
